<compile_context>
chip_gen: v5e
topology: v5e:2x2
jax: 0.10.0
libtpu: 0.0.40
codegen_flags: <defaults>
</compile_context>

<pallas_src>
import jax
import jax.numpy as jnp
from jax import lax
from jax.experimental import pallas as pl
from jax.experimental.pallas import tpu as pltpu


# -----------------------------------------------------------------------------
# Kernel 1: conv as transposed GEMM + per-tile per-channel sum / sum-of-squares
# -----------------------------------------------------------------------------
def _conv_stats_kernel(w_ref, p_ref, y_ref, s_ref, q_ref):
    # w_ref: (Cout, K)       repacked conv weight, resident across the grid
    # p_ref: (K, TP)         im2col patch tile (pixels on the 128-lane axis)
    # y_ref: (Cout, TP)      conv output tile (lane-dense -> unmasked stores)
    # s_ref: (1, Cout, 1)    per-tile per-channel sum
    # q_ref: (1, Cout, 1)    per-tile per-channel sum of squares
    y = jnp.dot(w_ref[...], p_ref[...], preferred_element_type=jnp.float32)
    y_ref[...] = y
    s_ref[...] = jnp.sum(y, axis=1, keepdims=True)[None]
    q_ref[...] = jnp.sum(y * y, axis=1, keepdims=True)[None]


# -----------------------------------------------------------------------------
# Kernel 2: apply the per-channel affine (scale/shift broadcast along lanes)
# -----------------------------------------------------------------------------
def _bn_apply_kernel(y_ref, scale_ref, shift_ref, o_ref):
    o_ref[...] = y_ref[...] * scale_ref[...] + shift_ref[...]


def _ceil_to(v, m):
    return -(-v // m) * m


def _block_bytes(shape, itemsize=4):
    """Crude (8,128)-padded VMEM footprint of one block."""
    if len(shape) == 1:
        return _ceil_to(shape[0] * itemsize, 512)
    lead = 1
    for d in shape[:-2]:
        lead *= d
    return lead * _ceil_to(shape[-2], 8) * _ceil_to(shape[-1], 128) * itemsize


def conv_bn(x_nchw, w_oihw, gamma, beta, *, stride=1, pad=1, eps=1e-5):
    """ConvBn forward.  x_nchw: (N, Cin, H, W) -> (N, Cout, Ho, Wo)."""
    N, Cin, H, W = x_nchw.shape
    Cout, Cin2, KH, KW = w_oihw.shape
    assert Cin2 == Cin
    assert stride == 1, "kernel specialized to the module's stride=1 path"
    Ho = (H + 2 * pad - KH) // stride + 1
    Wo = (W + 2 * pad - KW) // stride + 1
    K = KH * KW * Cin          # contraction length
    P = N * Ho * Wo            # total output pixels (lane axis)

    # Pixel tile on the lane axis: largest multiple of 128 that leaves >= 2 tiles.
    TP = P
    for cand in (512, 256, 128):
        if P % cand == 0 and P >= 2 * cand:
            TP = cand
            break
    NT = P // TP

    # ---- XLA-side layout glue: NHWC pad, im2col, weight repack ----------------
    x = jnp.transpose(x_nchw, (0, 2, 3, 1)).astype(jnp.float32)          # NHWC
    xp = jnp.pad(x, ((0, 0), (pad, pad), (pad, pad), (0, 0)))            # (N,Hp,Wp,Cin)
    cols = [xp[:, dy:dy + Ho, dx:dx + Wo, :]
            for dy in range(KH) for dx in range(KW)]                     # 9x (N,Ho,Wo,Cin)
    patches_t = jnp.stack(cols, axis=3).reshape(P, K).T                  # (K, P)
    wmat = jnp.transpose(w_oihw, (0, 2, 3, 1)).reshape(Cout, K)          # (Cout, K)
    wmat = wmat.astype(jnp.float32)

    # Explicit VMEM guard (double-buffered input blocks + output tiles).
    vmem_est = (2 * _block_bytes((Cout, K)) + 2 * _block_bytes((K, TP))
                + 2 * _block_bytes((Cout, TP)) + 4 * _block_bytes((1, Cout, 1)))
    assert vmem_est < 12 * 1024 * 1024, (
        f"per-step VMEM estimate {vmem_est} B too large; shrink TP or tile Cout/K")

    # ---- Pass 1: conv GEMM + per-tile channel statistics ----------------------
    conv_slab, psum, psq = pl.pallas_call(
        _conv_stats_kernel,
        out_shape=(
            jax.ShapeDtypeStruct((Cout, P), jnp.float32),
            jax.ShapeDtypeStruct((NT, Cout, 1), jnp.float32),
            jax.ShapeDtypeStruct((NT, Cout, 1), jnp.float32),
        ),
        grid=(NT,),
        in_specs=[
            pl.BlockSpec((Cout, K), lambda i: (0, 0)),
            pl.BlockSpec((K, TP), lambda i: (0, i)),
        ],
        out_specs=(
            pl.BlockSpec((Cout, TP), lambda i: (0, i)),
            pl.BlockSpec((1, Cout, 1), lambda i: (i, 0, 0)),
            pl.BlockSpec((1, Cout, 1), lambda i: (i, 0, 0)),
        ),
        compiler_params=pltpu.CompilerParams(
            dimension_semantics=("parallel",)),
    )(wmat, patches_t)

    # ---- Tiny O(Cout) finalize (train-mode / biased variance) -----------------
    count = float(P)
    total = jnp.sum(psum, axis=0)[:, 0]                 # (Cout,)
    totsq = jnp.sum(psq, axis=0)[:, 0]                  # (Cout,)
    mean = total / count
    var = totsq / count - mean * mean                   # biased variance
    inv = lax.rsqrt(var + eps)
    scale = (gamma.astype(jnp.float32) * inv).reshape(Cout, 1)
    shift = (beta.astype(jnp.float32) - mean * gamma.astype(jnp.float32) * inv
             ).reshape(Cout, 1)

    # ---- Pass 2: apply the per-channel affine (lane-dense) --------------------
    out_slab = pl.pallas_call(
        _bn_apply_kernel,
        out_shape=jax.ShapeDtypeStruct((Cout, P), jnp.float32),
        grid=(NT,),
        in_specs=[
            pl.BlockSpec((Cout, TP), lambda i: (0, i)),
            pl.BlockSpec((Cout, 1), lambda i: (0, 0)),
            pl.BlockSpec((Cout, 1), lambda i: (0, 0)),
        ],
        out_specs=pl.BlockSpec((Cout, TP), lambda i: (0, i)),
        compiler_params=pltpu.CompilerParams(
            dimension_semantics=("parallel",)),
    )(conv_slab, scale, shift)

    out = out_slab.reshape(Cout, N, Ho, Wo)
    return jnp.transpose(out, (1, 0, 2, 3))             # NCHW


def _reference(x_nchw, w_oihw, gamma, beta, *, stride=1, pad=1, eps=1e-5):
    """Pure-JAX reference (lax conv + manual train-mode BN), NCHW."""
    y = lax.conv_general_dilated(
        x_nchw, w_oihw, window_strides=(stride, stride),
        padding=((pad, pad), (pad, pad)),
        dimension_numbers=("NCHW", "OIHW", "NCHW"),
        precision=lax.Precision.HIGHEST)
    mean = jnp.mean(y, axis=(0, 2, 3), keepdims=True)
    var = jnp.mean((y - mean) ** 2, axis=(0, 2, 3), keepdims=True)
    yn = (y - mean) * lax.rsqrt(var + eps)
    return yn * gamma.reshape(1, -1, 1, 1) + beta.reshape(1, -1, 1, 1)


if __name__ == "__main__":
    key = jax.random.PRNGKey(0)
    kx, kw = jax.random.split(key)

    # Small shapes consistent with the module: NCHW input, Conv2d(4 -> 8, k=3, s=1, p=1).
    N, Cin, H, W = 2, 4, 16, 16
    Cout, KH, KW = 8, 3, 3

    x = jax.random.normal(kx, (N, Cin, H, W), dtype=jnp.float32)

    fan_in = Cin * KH * KW
    bound = (1.0 / fan_in) ** 0.5
    w = jax.random.uniform(kw, (Cout, Cin, KH, KW), jnp.float32,
                           minval=-bound, maxval=bound)
    gamma = 1.0 + 0.1 * jnp.arange(Cout, dtype=jnp.float32)
    beta = 0.05 * jnp.arange(Cout, dtype=jnp.float32)

    conv_bn_jit = jax.jit(conv_bn)
    out = jax.block_until_ready(conv_bn_jit(x, w, gamma, beta))

    ref = jax.block_until_ready(_reference(x, w, gamma, beta, stride=1, pad=1))
    assert out.shape == (N, Cout, H, W)
    max_diff = float(jnp.max(jnp.abs(out - ref)))
    assert jnp.allclose(out, ref, atol=1e-3, rtol=1e-3), (
        f"mismatch vs reference, max abs diff = {max_diff}")

    print("KERNEL_OK")
</pallas_src>

<mosaic_0001>
module attributes {stable_mosaic.version = 11 : i64} {
  func.func @_conv_stats_kernel(%arg0: i32, %arg1: memref<8x36xf32, #tpu.memory_space<vmem>>, %arg2: memref<36x256xf32, #tpu.memory_space<vmem>>, %arg3: memref<8x256xf32, #tpu.memory_space<vmem>>, %arg4: memref<1x8x1xf32, #tpu.memory_space<vmem>>, %arg5: memref<1x8x1xf32, #tpu.memory_space<vmem>>) attributes {dimension_semantics = [#tpu.dimension_semantics<parallel>], iteration_bounds = array<i64: 2>, scalar_prefetch = 0 : i64, scratch_operands = 0 : i64, tpu.core_type = #tpu.core_type<tc>, window_params = [{pipeline_mode = #tpu.pipeline_mode<synchronous>, transform_indices = @transform_0, window_bounds = array<i64: 8, 36>}, {transform_indices = @transform_1, window_bounds = array<i64: 36, 256>}, {transform_indices = @transform_2, window_bounds = array<i64: 8, 256>}, {transform_indices = @transform_3, window_bounds = array<i64: 1, 8, 1>}, {transform_indices = @transform_4, window_bounds = array<i64: 1, 8, 1>}]} {
    %c0 = arith.constant 0 : index
    %c0_0 = arith.constant 0 : index
    %0 = vector.load %arg1[%c0, %c0_0] : memref<8x36xf32, #tpu.memory_space<vmem>>, vector<8x36xf32>
    %c0_1 = arith.constant 0 : index
    %c0_2 = arith.constant 0 : index
    %1 = vector.load %arg2[%c0_1, %c0_2] : memref<36x256xf32, #tpu.memory_space<vmem>>, vector<36x256xf32>
    %cst = arith.constant dense<0.000000e+00> : vector<8x256xf32>
    %2 = tpu.matmul %0, %1, %cst {dimension_numbers = #tpu.dot_dimension_numbers<[1], [0], [0], [1], [0, 0, 1, 1], [], []>} : vector<8x36xf32>, vector<36x256xf32>, vector<8x256xf32> -> vector<8x256xf32>
    %c0_3 = arith.constant 0 : index
    %c0_4 = arith.constant 0 : index
    %3 = vector.load %arg3[%c0_3, %c0_4] : memref<8x256xf32, #tpu.memory_space<vmem>>, vector<8x256xf32>
    tpu.vector_store %arg3[%c0_3, %c0_4], %2 {strides = array<i32>} : memref<8x256xf32, #tpu.memory_space<vmem>>, vector<8x256xf32>,
    %cst_5 = arith.constant dense<0.000000e+00> : vector<8xf32>
    %4 = vector.multi_reduction <add>, %2, %cst_5 [1] : vector<8x256xf32> to vector<8xf32>
    %5 = vector.shape_cast %4 : vector<8xf32> to vector<8x1xf32>
    %6 = vector.shape_cast %5 : vector<8x1xf32> to vector<1x8x1xf32>
    %c0_6 = arith.constant 0 : index
    %c0_7 = arith.constant 0 : index
    %c0_8 = arith.constant 0 : index
    %7 = vector.load %arg4[%c0_6, %c0_7, %c0_8] : memref<1x8x1xf32, #tpu.memory_space<vmem>>, vector<1x8x1xf32>
    tpu.vector_store %arg4[%c0_6, %c0_7, %c0_8], %6 {strides = array<i32>} : memref<1x8x1xf32, #tpu.memory_space<vmem>>, vector<1x8x1xf32>,
    %8 = arith.mulf %2, %2 : vector<8x256xf32>
    %cst_9 = arith.constant dense<0.000000e+00> : vector<8xf32>
    %9 = vector.multi_reduction <add>, %8, %cst_9 [1] : vector<8x256xf32> to vector<8xf32>
    %10 = vector.shape_cast %9 : vector<8xf32> to vector<8x1xf32>
    %11 = vector.shape_cast %10 : vector<8x1xf32> to vector<1x8x1xf32>
    %c0_10 = arith.constant 0 : index
    %c0_11 = arith.constant 0 : index
    %c0_12 = arith.constant 0 : index
    %12 = vector.load %arg5[%c0_10, %c0_11, %c0_12] : memref<1x8x1xf32, #tpu.memory_space<vmem>>, vector<1x8x1xf32>
    tpu.vector_store %arg5[%c0_10, %c0_11, %c0_12], %11 {strides = array<i32>} : memref<1x8x1xf32, #tpu.memory_space<vmem>>, vector<1x8x1xf32>,
    return
  }
  func.func @transform_0(%arg0: i32) -> (i32, i32) {
    %c0_i32 = arith.constant 0 : i32
    %c0_i32_0 = arith.constant 0 : i32
    %c0_i32_1 = arith.constant 0 : i32
    return %c0_i32, %c0_i32_0 : i32, i32
  }
  func.func @transform_1(%arg0: i32) -> (i32, i32) {
    %c0_i32 = arith.constant 0 : i32
    %c0_i32_0 = arith.constant 0 : i32
    return %c0_i32, %arg0 : i32, i32
  }
  func.func @transform_2(%arg0: i32) -> (i32, i32) {
    %c0_i32 = arith.constant 0 : i32
    %c0_i32_0 = arith.constant 0 : i32
    return %c0_i32, %arg0 : i32, i32
  }
  func.func @transform_3(%arg0: i32) -> (i32, i32, i32) {
    %c0_i32 = arith.constant 0 : i32
    %c0_i32_0 = arith.constant 0 : i32
    %c0_i32_1 = arith.constant 0 : i32
    return %arg0, %c0_i32, %c0_i32_0 : i32, i32, i32
  }
  func.func @transform_4(%arg0: i32) -> (i32, i32, i32) {
    %c0_i32 = arith.constant 0 : i32
    %c0_i32_0 = arith.constant 0 : i32
    %c0_i32_1 = arith.constant 0 : i32
    return %arg0, %c0_i32, %c0_i32_0 : i32, i32, i32
  }
}

module attributes {stable_mosaic.version = 11 : i64} {
  func.func @_bn_apply_kernel(%arg0: i32, %arg1: memref<8x256xf32, #tpu.memory_space<vmem>>, %arg2: memref<8x1xf32, #tpu.memory_space<vmem>>, %arg3: memref<8x1xf32, #tpu.memory_space<vmem>>, %arg4: memref<8x256xf32, #tpu.memory_space<vmem>>) attributes {dimension_semantics = [#tpu.dimension_semantics<parallel>], iteration_bounds = array<i64: 2>, scalar_prefetch = 0 : i64, scratch_operands = 0 : i64, tpu.core_type = #tpu.core_type<tc>, window_params = [{transform_indices = @transform_0, window_bounds = array<i64: 8, 256>}, {pipeline_mode = #tpu.pipeline_mode<synchronous>, transform_indices = @transform_1, window_bounds = array<i64: 8, 1>}, {pipeline_mode = #tpu.pipeline_mode<synchronous>, transform_indices = @transform_2, window_bounds = array<i64: 8, 1>}, {transform_indices = @transform_3, window_bounds = array<i64: 8, 256>}]} {
    %c0 = arith.constant 0 : index
    %c0_0 = arith.constant 0 : index
    %0 = vector.load %arg1[%c0, %c0_0] : memref<8x256xf32, #tpu.memory_space<vmem>>, vector<8x256xf32>
    %c0_1 = arith.constant 0 : index
    %c0_2 = arith.constant 0 : index
    %1 = vector.load %arg2[%c0_1, %c0_2] : memref<8x1xf32, #tpu.memory_space<vmem>>, vector<8x1xf32>
    %2 = vector.broadcast %1 : vector<8x1xf32> to vector<8x256xf32>
    %3 = arith.mulf %0, %2 : vector<8x256xf32>
    %c0_3 = arith.constant 0 : index
    %c0_4 = arith.constant 0 : index
    %4 = vector.load %arg3[%c0_3, %c0_4] : memref<8x1xf32, #tpu.memory_space<vmem>>, vector<8x1xf32>
    %5 = vector.broadcast %4 : vector<8x1xf32> to vector<8x256xf32>
    %6 = arith.addf %3, %5 : vector<8x256xf32>
    %c0_5 = arith.constant 0 : index
    %c0_6 = arith.constant 0 : index
    %7 = vector.load %arg4[%c0_5, %c0_6] : memref<8x256xf32, #tpu.memory_space<vmem>>, vector<8x256xf32>
    tpu.vector_store %arg4[%c0_5, %c0_6], %6 {strides = array<i32>} : memref<8x256xf32, #tpu.memory_space<vmem>>, vector<8x256xf32>,
    return
  }
  func.func @transform_0(%arg0: i32) -> (i32, i32) {
    %c0_i32 = arith.constant 0 : i32
    %c0_i32_0 = arith.constant 0 : i32
    return %c0_i32, %arg0 : i32, i32
  }
  func.func @transform_1(%arg0: i32) -> (i32, i32) {
    %c0_i32 = arith.constant 0 : i32
    %c0_i32_0 = arith.constant 0 : i32
    %c0_i32_1 = arith.constant 0 : i32
    return %c0_i32, %c0_i32_0 : i32, i32
  }
  func.func @transform_2(%arg0: i32) -> (i32, i32) {
    %c0_i32 = arith.constant 0 : i32
    %c0_i32_0 = arith.constant 0 : i32
    %c0_i32_1 = arith.constant 0 : i32
    return %c0_i32, %c0_i32_0 : i32, i32
  }
  func.func @transform_3(%arg0: i32) -> (i32, i32) {
    %c0_i32 = arith.constant 0 : i32
    %c0_i32_0 = arith.constant 0 : i32
    return %c0_i32, %arg0 : i32, i32
  }
}

</mosaic_0001>

<llo_original>
// kernel: conv_bn.2
$region0: #{conv_bn.2}
  #allocation0 [shape = 'u32[]', space=smem, size = 0x4, offset = 0x4, fixed_abs, tag = 'smem constant byte address 0x4 - core index']
  #allocation1 [shape = 'u32[72,128]{1,0:T(1,128)}', space=vmem, size = 0x9000, scoped, tag = 'internal scratch']
  %s0 = inlined_call_operand.vmem [shape: f32[8,36], index: 0, kind: input, shape index: {}]
  %s1 = inlined_call_operand.vmem [shape: f32[36,512], index: 1, kind: input, shape index: {}]
  %s2 = inlined_call_operand.vmem [shape: f32[8,512], index: 2, kind: output, shape index: {0}]
  %s3 = inlined_call_operand.vmem [shape: f32[2,8,1], index: 3, kind: output, shape index: {1}]
  %s4 = inlined_call_operand.vmem [shape: f32[2,8,1], index: 4, kind: output, shape index: {2}]
  %5 = xla_tuple %s2, %s3, %s4
  %s6 = sld [smem:[#allocation0]]
  $region80: #{conv_bn.2} parent=0
    _
  %s8 = ssub.s32 1, %s6
  %s9 = scalar_select 0, %s8, %s6
  $region1: #{conv_bn.2} parent=0
    #allocation2 [shape = 'u8[81920]{0}', space=vmem, size = 0x14000, scoped, tag = 'input window, operand 1']
    loop: start=0, step=1, limit=4
    $region2: #{conv_bn.2} parent=1 // loop_pre_header
      _
    $region3: #{conv_bn.2} parent=1 // loop_header
      %s11 = sphi 0, %s15
      %p12 = scmp.ge.s32.totalorder %s11, 4
      %s19 = sphi 0, %s19
      %s21 = sphi 0, %s19
      %s22 = sphi 0, %s21
      %s36 = sphi 0, %s22
      %s42 = sphi 0, %s44
      %s45 = sphi 0, %s42
      %s46 = sphi 0, %s45
      %s62 = sphi 0, %s46
      %s68 = sphi 0, %s70
      %s71 = sphi 0, %s68
      %s72 = sphi 0, %s71
      %s88 = sphi 0, %s72
      %s94 = sphi 0, %s96
      %s97 = sphi 0, %s94
      %s98 = sphi 0, %s97
      %s114 = sphi 0, %s98
      %s120 = sphi 0, %s122
      %s123 = sphi 0, %s120
      %s124 = sphi 0, %s123
      %s140 = sphi 0, %s124
    $region4: #{conv_bn.2} parent=1 // loop_header_branch
      %14 = sbr.rel (%p12) target = $region8
    $region5: #{conv_bn.2} parent=1 // loop_body
      %s16 = ssub.s32 %s11, 1
      %s17 = ssub.s32 %s11, 2
      %s18 = sadd.s32 %s11, 1
      %s20 = sadd.s32 %s19, 1
      %p23 = scmp.eq.s32.totalorder %s11, 1
      %p24 = scmp.ne.s32.totalorder %s19, %s21
      %p25 = scmp.eq.s32.totalorder %s11, 0
      %p26 = por %p24, %p25
      %p27 = scmp.ne.s32.totalorder %s19, %s21
      %p28 = scmp.eq.s32.totalorder %s16, 1
      %p29 = por %p27, %p28
      %p30 = scmp.ne.s32.totalorder %s21, %s22
      %p31 = scmp.eq.s32.totalorder %s16, 0
      %p32 = por %p30, %p31
      %p33 = scmp.ne.s32.totalorder %s21, %s22
      %p34 = scmp.eq.s32.totalorder %s17, 1
      %p35 = por %p33, %p34
      %p37 = scmp.ne.s32.totalorder %s22, %s36
      %p38 = scmp.eq.s32.totalorder %s17, 0
      %p39 = por %p37, %p38
      %s40 = ssub.s32 %s11, %s18
      %p41 = scmp.eq.s32.totalorder %s40, 0
      %s43 = sadd.s32 %s42, 1
      %s44 = scalar_select %p41, %s42, %s43
      %p47 = pneg %p41
      %p48 = scmp.eq.s32.totalorder %s11, 1
      %p49 = por %p47, %p48
      %p50 = scmp.ne.s32.totalorder %s42, %s45
      %p51 = scmp.eq.s32.totalorder %s11, 0
      %p52 = por %p50, %p51
      %p53 = scmp.ne.s32.totalorder %s42, %s45
      %p54 = scmp.eq.s32.totalorder %s16, 1
      %p55 = por %p53, %p54
      %p56 = scmp.ne.s32.totalorder %s45, %s46
      %p57 = scmp.eq.s32.totalorder %s16, 0
      %p58 = por %p56, %p57
      %p59 = scmp.ne.s32.totalorder %s45, %s46
      %p60 = scmp.eq.s32.totalorder %s17, 1
      %p61 = por %p59, %p60
      %p63 = scmp.ne.s32.totalorder %s46, %s62
      %p64 = scmp.eq.s32.totalorder %s17, 0
      %p65 = por %p63, %p64
      %s66 = ssub.s32 %s11, %s18
      %p67 = scmp.eq.s32.totalorder %s66, 0
      %s69 = sadd.s32 %s68, 1
      %s70 = scalar_select %p67, %s68, %s69
      %p73 = pneg %p67
      %p74 = scmp.eq.s32.totalorder %s11, 1
      %p75 = por %p73, %p74
      %p76 = scmp.ne.s32.totalorder %s68, %s71
      %p77 = scmp.eq.s32.totalorder %s11, 0
      %p78 = por %p76, %p77
      %p79 = scmp.ne.s32.totalorder %s68, %s71
      %p80 = scmp.eq.s32.totalorder %s16, 1
      %p81 = por %p79, %p80
      %p82 = scmp.ne.s32.totalorder %s71, %s72
      %p83 = scmp.eq.s32.totalorder %s16, 0
      %p84 = por %p82, %p83
      %p85 = scmp.ne.s32.totalorder %s71, %s72
      %p86 = scmp.eq.s32.totalorder %s17, 1
      %p87 = por %p85, %p86
      %p89 = scmp.ne.s32.totalorder %s72, %s88
      %p90 = scmp.eq.s32.totalorder %s17, 0
      %p91 = por %p89, %p90
      %s92 = ssub.s32 %s11, %s18
      %p93 = scmp.eq.s32.totalorder %s92, 0
      %s95 = sadd.s32 %s94, 1
      %s96 = scalar_select %p93, %s94, %s95
      %p99 = pneg %p93
      %p100 = scmp.eq.s32.totalorder %s11, 1
      %p101 = por %p99, %p100
      %p102 = scmp.ne.s32.totalorder %s94, %s97
      %p103 = scmp.eq.s32.totalorder %s11, 0
      %p104 = por %p102, %p103
      %p105 = scmp.ne.s32.totalorder %s94, %s97
      %p106 = scmp.eq.s32.totalorder %s16, 1
      %p107 = por %p105, %p106
      %p108 = scmp.ne.s32.totalorder %s97, %s98
      %p109 = scmp.eq.s32.totalorder %s16, 0
      %p110 = por %p108, %p109
      %p111 = scmp.ne.s32.totalorder %s97, %s98
      %p112 = scmp.eq.s32.totalorder %s17, 1
      %p113 = por %p111, %p112
      %p115 = scmp.ne.s32.totalorder %s98, %s114
      %p116 = scmp.eq.s32.totalorder %s17, 0
      %p117 = por %p115, %p116
      %s118 = ssub.s32 %s11, %s18
      %p119 = scmp.eq.s32.totalorder %s118, 0
      %s121 = sadd.s32 %s120, 1
      %s122 = scalar_select %p119, %s120, %s121
      %p125 = pneg %p119
      %p126 = scmp.eq.s32.totalorder %s11, 1
      %p127 = por %p125, %p126
      %p128 = scmp.ne.s32.totalorder %s120, %s123
      %p129 = scmp.eq.s32.totalorder %s11, 0
      %p130 = por %p128, %p129
      %p131 = scmp.ne.s32.totalorder %s120, %s123
      %p132 = scmp.eq.s32.totalorder %s16, 1
      %p133 = por %p131, %p132
      %p134 = scmp.ne.s32.totalorder %s123, %s124
      %p135 = scmp.eq.s32.totalorder %s16, 0
      %p136 = por %p134, %p135
      %p137 = scmp.ne.s32.totalorder %s123, %s124
      %p138 = scmp.eq.s32.totalorder %s17, 1
      %p139 = por %p137, %p138
      %p141 = scmp.ne.s32.totalorder %s124, %s140
      %p142 = scmp.eq.s32.totalorder %s17, 0
      %p143 = por %p141, %p142
      %p144 = scmp.le.s32.totalorder 1, %s11
      %p145 = scmp.lt.s32.totalorder %s11, 3
      %p146 = pnand %p144, %p145
      %p147 = pneg %p146
      // Predicated region
      $region9: #{conv_bn.2} parent=5 // pred_check
        _
      $region10: #{conv_bn.2} parent=5 // pred_check_branch
        %149 = sbr.rel (%p146) target = $region12
      $region11: #{conv_bn.2} parent=5 // pred_region
        %s150 = ssub.s32 %s11, 1
        // Predicated region
        $region13: #{conv_bn.2} parent=11 // pred_check
          %p151 = pneg %p32
        $region14: #{conv_bn.2} parent=11 // pred_check_branch
          %153 = sbr.rel (%p151) target = $region16
        $region15: #{conv_bn.2} parent=11 // pred_region
          _
        $region16: #{conv_bn.2} parent=11 // pred_fallthru
          _
      $region12: #{conv_bn.2} parent=5 // pred_fallthru
        _
      %p154 = scmp.lt.s32.totalorder %s11, 2
      // Predicated region
      $region17: #{conv_bn.2} parent=5 // pred_check
        %p155 = pneg %p154
      $region18: #{conv_bn.2} parent=5 // pred_check_branch
        %157 = sbr.rel (%p155) target = $region20
      $region19: #{conv_bn.2} parent=5 // pred_region
        // Predicated region
        $region21: #{conv_bn.2} parent=19 // pred_check
          %p158 = pneg %p52
        $region22: #{conv_bn.2} parent=19 // pred_check_branch
          %160 = sbr.rel (%p158) target = $region24
        $region23: #{conv_bn.2} parent=19 // pred_region
          %s161 = sand.u32 %s42, 1
          %s162 = sand.u32 %s42, 1
          %s163 = smul.addr %s162, 80
          %s164 = scalar_lea.vmem [#allocation2], %s163
          %s165 = smul.u32 2, %s11
          %s166 = smul.addr %s165, 8
          %s167 = scalar_lea.vmem %s1, %s166
          // Predicated region
          $region25: #{conv_bn.2} parent=23 // pred_check
            _
          $region26: #{conv_bn.2} parent=23 // pred_check_branch
            %169 = sbr.rel (0) target = $region28
          $region27: #{conv_bn.2} parent=23 // pred_region
            // Predicated region
            $region29: #{conv_bn.2} parent=27 // pred_check
              _
            $region30: #{conv_bn.2} parent=27 // pred_check_branch
              %171 = sbr.rel (0) target = $region32
            $region31: #{conv_bn.2} parent=27 // pred_region
              loop: start=0, step=1, limit=1
              $region33: #{conv_bn.2} parent=31 // loop_pre_header
                _
              $region34: #{conv_bn.2} parent=31 // loop_header
                %s173 = sphi 0, %s177
                %p174 = scmp.ge.s32.totalorder %s173, 1
                %s178 = sphi %s167, %s167
                %s179 = sphi %s164, %s164
              $region35: #{conv_bn.2} parent=31 // loop_header_branch
                %176 = sbr.rel (%p174) target = $region39
              $region36: #{conv_bn.2} parent=31 // loop_body
                %v180 = vld [vmem:[%s178] sm:$0xff]
                %181 = vst [vmem:[%s179] sm:$0xff] %v180
                %v182 = vld [vmem:[%s178 + $0x8] sm:$0xff]
                %183 = vst [vmem:[%s179 + $0x8] sm:$0xff] %v182
                %v184 = vld [vmem:[%s178 + $0x20] sm:$0xff]
                %185 = vst [vmem:[%s179 + $0x10] sm:$0xff] %v184
                %v186 = vld [vmem:[%s178 + $0x28] sm:$0xff]
                %187 = vst [vmem:[%s179 + $0x18] sm:$0xff] %v186
                %v188 = vld [vmem:[%s178 + $0x40] sm:$0xff]
                %189 = vst [vmem:[%s179 + $0x20] sm:$0xff] %v188
                %v190 = vld [vmem:[%s178 + $0x48] sm:$0xff]
                %191 = vst [vmem:[%s179 + $0x28] sm:$0xff] %v190
                %v192 = vld [vmem:[%s178 + $0x60] sm:$0xff]
                %193 = vst [vmem:[%s179 + $0x30] sm:$0xff] %v192
                %v194 = vld [vmem:[%s178 + $0x68] sm:$0xff]
                %195 = vst [vmem:[%s179 + $0x38] sm:$0xff] %v194
                %v196 = vld [vmem:[%s178 + $0x80] sm:$0xff]
                %197 = vst [vmem:[%s179 + $0x40] sm:$0xff] %v196
                %v198 = vld [vmem:[%s178 + $0x88] sm:$0xff]
                %199 = vst [vmem:[%s179 + $0x48] sm:$0xff] %v198
              $region37: #{conv_bn.2} parent=31 // loop_footer
                %s177 = sadd.s32 1, %s173
              $region38: #{conv_bn.2} parent=31 // loop_footer_branch
                %172 = sbr.rel target = $region34
              $region39: #{conv_bn.2} parent=31 // loop_exit
                _
            $region32: #{conv_bn.2} parent=27 // pred_fallthru
              _
            // Predicated region
            $region40: #{conv_bn.2} parent=27 // pred_check
              _
            $region41: #{conv_bn.2} parent=27 // pred_check_branch
              %201 = sbr.rel target = $region43
            $region42: #{conv_bn.2} parent=27 // pred_region
              _
            $region43: #{conv_bn.2} parent=27 // pred_fallthru
              _
          $region28: #{conv_bn.2} parent=23 // pred_fallthru
            _
          %202 = vnop
        $region24: #{conv_bn.2} parent=19 // pred_fallthru
          _
      $region20: #{conv_bn.2} parent=5 // pred_fallthru
        _
      %p203 = scmp.le.s32.totalorder 1, %s11
      %p204 = scmp.lt.s32.totalorder %s11, 3
      %p205 = pnand %p203, %p204
      %p206 = pneg %p205
      // Predicated region
      $region44: #{conv_bn.2} parent=5 // pred_check
        _
      $region45: #{conv_bn.2} parent=5 // pred_check_branch
        %208 = sbr.rel (%p205) target = $region47
      $region46: #{conv_bn.2} parent=5 // pred_region
        %s209 = ssub.s32 %s11, 1
        %s210 = sand.u32 %s45, 1
        %s211 = sand.u32 %s45, 1
        %s212 = smul.addr %s211, 80
        %s213 = scalar_lea.vmem [#allocation2], %s212
        // Predicated region
        $region48: #{conv_bn.2} parent=46 // pred_check
          %p214 = pneg %p58
        $region49: #{conv_bn.2} parent=46 // pred_check_branch
          %216 = sbr.rel (%p214) target = $region51
        $region50: #{conv_bn.2} parent=46 // pred_region
          _
        $region51: #{conv_bn.2} parent=46 // pred_fallthru
          _
        %p217 = pneg %p32
        %p218 = pneg %p29
        %s219 = sand.u32 %s45, 1
        %s220 = sand.u32 %s45, 1
        %s221 = smul.addr %s220, 80
        %s222 = scalar_lea.vmem [#allocation2], %s221
        %p223 = pneg %p58
        %p224 = pneg %p55
        %p225 = pneg %p84
        %p226 = pneg %p81
        %s227 = smul.u32 2, %s16
        %p228 = scmp.lt.s32.totalorder %s227, 3
        %s229 = scalar_select %p228, %s227, 3
        %s230 = smul.addr %s229, 8
        %s231 = scalar_lea.vmem %s2, %s230
        %p232 = pneg %p110
        %p233 = pneg %p107
        %p234 = scmp.lt.s32.totalorder %s16, 1
        %s235 = scalar_select %p234, %s16, 1
        %s236 = smul.addr %s235, 8
        %s237 = scalar_lea.vmem %s3, %s236
        %p238 = pneg %p136
        %p239 = pneg %p133
        %p240 = scmp.lt.s32.totalorder %s16, 1
        %s241 = scalar_select %p240, %s16, 1
        %s242 = smul.addr %s241, 8
        %s243 = scalar_lea.vmem %s4, %s242
        %s244 = smul.u32 2, %s16
        %s245 = smul.u32 2, %s16
        %p246 = scmp.lt.s32.totalorder %s245, 3
        %s247 = scalar_select %p246, %s245, 3
        %s248 = smul.addr %s247, 8
        %s249 = scalar_lea.vmem %s2, %s248
        %s250 = smul.u32 2, %s16
        %p251 = scmp.lt.s32.totalorder %s16, 1
        %s252 = scalar_select %p251, %s16, 1
        %s253 = smul.addr %s252, 8
        %s254 = scalar_lea.vmem %s3, %s253
        %p255 = scmp.lt.s32.totalorder %s16, 1
        %s256 = scalar_select %p255, %s16, 1
        %s257 = smul.addr %s256, 8
        %s258 = scalar_lea.vmem %s4, %s257
        %v259 = vld [vmem:[%s0] sm:$0xff]
        %v260 = vld [vmem:[%s213] sm:$0xff]
        %v261 = vld [vmem:[%s213 + $0x8] sm:$0xff]
        %v262 = vld [vmem:[%s213 + $0x10] sm:$0xff]
        %v263 = vld [vmem:[%s213 + $0x18] sm:$0xff]
        %v264 = vld [vmem:[%s213 + $0x20] sm:$0xff]
        %v265 = vld [vmem:[%s213 + $0x28] sm:$0xff]
        %v266 = vld [vmem:[%s213 + $0x30] sm:$0xff]
        %v267 = vld [vmem:[%s213 + $0x38] sm:$0xff]
        %v268 = vld [vmem:[%s213 + $0x40] sm:$0xf]
        %v269 = vld [vmem:[%s213 + $0x48] sm:$0xf]
        %vm270 = vcmask 293888
        %v272 = vsel %vm270, %v259, 0
        %vm274 = vcmask 1043456
        %v276 = vsel %vm274, %v268, 0
        %v279 = vsel %vm274, %v269, 0
        %281 = vmatpush.msra.mxu0 0.0
        %282 = vmatpush.msra.mxu0 0.0
        %283 = vmatpush.msra.mxu0 0.0
        %284 = vmatpush.msra.mxu0 0.0
        %285 = vmatpush.msra.mxu0 0.0
        %286 = vmatpush.msra.mxu0 0.0
        %287 = vmatpush.msra.mxu0 0.0
        %288 = vmatpush.msra.mxu0 0.0
        %289 = vmatpush.msra.mxu0 0.0
        %290 = vmatpush.msra.mxu0 0.0
        %291 = vmatpush.msra.mxu0 0.0
        %292 = vmatpush.msra.mxu0 %v276
        %293 = vmatpush.msra.mxu0 %v266
        %294 = vmatpush.msra.mxu0 %v264
        %295 = vmatpush.msra.mxu0 %v262
        %296 = vmatpush.msra.mxu0 %v260
        %297 = vmatmul.f32.gmra.mxu0 %v272
        %v298 = vpop.f32.mrf.mxu0
        %v299 = vadd.f32 0.0, %v298
        %300 = vdwg.mxu0
        %301 = vmatpush.msra.mxu0 0.0
        %302 = vmatpush.msra.mxu0 0.0
        %303 = vmatpush.msra.mxu0 0.0
        %304 = vmatpush.msra.mxu0 0.0
        %305 = vmatpush.msra.mxu0 0.0
        %306 = vmatpush.msra.mxu0 0.0
        %307 = vmatpush.msra.mxu0 0.0
        %308 = vmatpush.msra.mxu0 0.0
        %309 = vmatpush.msra.mxu0 0.0
        %310 = vmatpush.msra.mxu0 0.0
        %311 = vmatpush.msra.mxu0 0.0
        %312 = vmatpush.msra.mxu0 %v279
        %313 = vmatpush.msra.mxu0 %v267
        %314 = vmatpush.msra.mxu0 %v265
        %315 = vmatpush.msra.mxu0 %v263
        %316 = vmatpush.msra.mxu0 %v261
        %317 = vmatmul.f32.gmra.mxu0 %v272
        %v318 = vpop.f32.mrf.mxu0
        %v319 = vadd.f32 0.0, %v318
        %320 = vdwg.mxu0
        %321 = vst [vmem:[%s249] sm:$0xff] %v299
        %322 = vst [vmem:[%s249 + $0x8] sm:$0xff] %v319
        %v323 = vadd.f32 %v299, %v319
        %324 = vadd.xlane.f32.xlu0 %v323
        %v325 = vpop.xlane.xlu0 %324
        %vm326 = vcmask 7168
        %327 = vst.msk [vmem:[%s254] sm:$0xff] %vm326, %v325
        %v328 = vmul.f32 %v299, %v299
        %v329 = vmul.f32 %v319, %v319
        %v330 = vadd.f32 %v328, %v329
        %331 = vadd.xlane.f32.xlu0 %v330
        %v332 = vpop.xlane.xlu0 %331
        %333 = vst.msk [vmem:[%s258] sm:$0xff] %vm326, %v332
        %s334 = smul.u32 2, %s16
        %p335 = scmp.lt.s32.totalorder %s334, 3
        %s336 = scalar_select %p335, %s334, 3
        %s337 = smul.addr %s336, 8
        %s338 = scalar_lea.vmem %s2, %s337
        %p339 = scmp.lt.s32.totalorder %s16, 1
        %s340 = scalar_select %p339, %s16, 1
        %s341 = smul.addr %s340, 8
        %s342 = scalar_lea.vmem %s3, %s341
        %p343 = scmp.lt.s32.totalorder %s16, 1
        %s344 = scalar_select %p343, %s16, 1
        %s345 = smul.addr %s344, 8
        %s346 = scalar_lea.vmem %s4, %s345
        // Predicated region
        $region52: #{conv_bn.2} parent=46 // pred_check
          %p347 = pneg %p81
        $region53: #{conv_bn.2} parent=46 // pred_check_branch
          %349 = sbr.rel (%p347) target = $region55
        $region54: #{conv_bn.2} parent=46 // pred_region
          %s350 = smul.u32 2, %s16
        $region55: #{conv_bn.2} parent=46 // pred_fallthru
          _
        // Predicated region
        $region56: #{conv_bn.2} parent=46 // pred_check
          %p351 = pneg %p107
        $region57: #{conv_bn.2} parent=46 // pred_check_branch
          %353 = sbr.rel (%p351) target = $region59
        $region58: #{conv_bn.2} parent=46 // pred_region
          _
        $region59: #{conv_bn.2} parent=46 // pred_fallthru
          _
        // Predicated region
        $region60: #{conv_bn.2} parent=46 // pred_check
          %p354 = pneg %p133
        $region61: #{conv_bn.2} parent=46 // pred_check_branch
          %356 = sbr.rel (%p354) target = $region63
        $region62: #{conv_bn.2} parent=46 // pred_region
          _
        $region63: #{conv_bn.2} parent=46 // pred_fallthru
          _
      $region47: #{conv_bn.2} parent=5 // pred_fallthru
        _
      %p357 = scmp.le.s32.totalorder 2, %s11
      // Predicated region
      $region64: #{conv_bn.2} parent=5 // pred_check
        %p358 = pneg %p357
      $region65: #{conv_bn.2} parent=5 // pred_check_branch
        %360 = sbr.rel (%p358) target = $region67
      $region66: #{conv_bn.2} parent=5 // pred_region
        %s361 = ssub.s32 %s11, 2
        // Predicated region
        $region68: #{conv_bn.2} parent=66 // pred_check
          %p362 = pneg %p87
        $region69: #{conv_bn.2} parent=66 // pred_check_branch
          %364 = sbr.rel (%p362) target = $region71
        $region70: #{conv_bn.2} parent=66 // pred_region
          %s365 = smul.u32 2, %s17
          %p366 = scmp.lt.s32.totalorder %s365, 3
          %s367 = scalar_select %p366, %s365, 3
          %s368 = smul.addr %s367, 8
          %s369 = scalar_lea.vmem %s2, %s368
        $region71: #{conv_bn.2} parent=66 // pred_fallthru
          _
        // Predicated region
        $region72: #{conv_bn.2} parent=66 // pred_check
          %p370 = pneg %p113
        $region73: #{conv_bn.2} parent=66 // pred_check_branch
          %372 = sbr.rel (%p370) target = $region75
        $region74: #{conv_bn.2} parent=66 // pred_region
          %p373 = scmp.lt.s32.totalorder %s17, 1
          %s374 = scalar_select %p373, %s17, 1
          %s375 = smul.addr %s374, 8
          %s376 = scalar_lea.vmem %s3, %s375
        $region75: #{conv_bn.2} parent=66 // pred_fallthru
          _
        // Predicated region
        $region76: #{conv_bn.2} parent=66 // pred_check
          %p377 = pneg %p139
        $region77: #{conv_bn.2} parent=66 // pred_check_branch
          %379 = sbr.rel (%p377) target = $region79
        $region78: #{conv_bn.2} parent=66 // pred_region
          %p380 = scmp.lt.s32.totalorder %s17, 1
          %s381 = scalar_select %p380, %s17, 1
          %s382 = smul.addr %s381, 8
          %s383 = scalar_lea.vmem %s4, %s382
        $region79: #{conv_bn.2} parent=66 // pred_fallthru
          _
      $region67: #{conv_bn.2} parent=5 // pred_fallthru
        _
    $region6: #{conv_bn.2} parent=1 // loop_footer
      %s15 = sadd.s32 1, %s11
    $region7: #{conv_bn.2} parent=1 // loop_footer_branch
      %10 = sbr.rel target = $region3
    $region8: #{conv_bn.2} parent=1 // loop_exit
      _

// kernel: conv_bn.3
$region0: #{conv_bn.3}
  #allocation0 [shape = 'u32[]', space=smem, size = 0x4, offset = 0x4, fixed_abs, tag = 'smem constant byte address 0x4 - core index']
  #allocation1 [shape = 'u32[72,128]{1,0:T(1,128)}', space=vmem, size = 0x9000, scoped, tag = 'internal scratch']
  %s0 = inlined_call_operand.vmem [shape: f32[8,512], index: 0, kind: input, shape index: {}]
  %s1 = inlined_call_operand.vmem [shape: f32[8,1], index: 1, kind: input, shape index: {}]
  %s2 = inlined_call_operand.vmem [shape: f32[8,1], index: 2, kind: input, shape index: {}]
  %s3 = inlined_call_operand.vmem [shape: f32[8,512], index: 3, kind: output, shape index: {}]
  %s4 = sld [smem:[#allocation0]]
  $region45: #{conv_bn.3} parent=0
    _
  %s6 = ssub.s32 1, %s4
  %s7 = scalar_select 0, %s6, %s4
  loop: start=0, step=1, limit=4
  $region2: #{conv_bn.3} parent=0 // loop_pre_header
    _
  $region3: #{conv_bn.3} parent=0 // loop_header
    %s9 = sphi 0, %s13
    %p10 = scmp.ge.s32.totalorder %s9, 4
    %s19 = sphi 0, %s21
    %s22 = sphi 0, %s19
    %s23 = sphi 0, %s22
    %s39 = sphi 0, %s23
    %s43 = sphi 0, %s43
    %s45 = sphi 0, %s43
    %s46 = sphi 0, %s45
    %s60 = sphi 0, %s46
    %s64 = sphi 0, %s64
    %s66 = sphi 0, %s64
    %s67 = sphi 0, %s66
    %s81 = sphi 0, %s67
    %s87 = sphi 0, %s89
    %s90 = sphi 0, %s87
    %s91 = sphi 0, %s90
    %s107 = sphi 0, %s91
  $region4: #{conv_bn.3} parent=0 // loop_header_branch
    %12 = sbr.rel (%p10) target = $region8
  $region5: #{conv_bn.3} parent=0 // loop_body
    %s14 = ssub.s32 %s9, 1
    %s15 = ssub.s32 %s9, 2
    %s16 = sadd.s32 %s9, 1
    %s17 = ssub.s32 %s9, %s16
    %p18 = scmp.eq.s32.totalorder %s17, 0
    %s20 = sadd.s32 %s19, 1
    %s21 = scalar_select %p18, %s19, %s20
    %p24 = pneg %p18
    %p25 = scmp.eq.s32.totalorder %s9, 1
    %p26 = por %p24, %p25
    %p27 = scmp.ne.s32.totalorder %s19, %s22
    %p28 = scmp.eq.s32.totalorder %s9, 0
    %p29 = por %p27, %p28
    %p30 = scmp.ne.s32.totalorder %s19, %s22
    %p31 = scmp.eq.s32.totalorder %s14, 1
    %p32 = por %p30, %p31
    %p33 = scmp.ne.s32.totalorder %s22, %s23
    %p34 = scmp.eq.s32.totalorder %s14, 0
    %p35 = por %p33, %p34
    %p36 = scmp.ne.s32.totalorder %s22, %s23
    %p37 = scmp.eq.s32.totalorder %s15, 1
    %p38 = por %p36, %p37
    %p40 = scmp.ne.s32.totalorder %s23, %s39
    %p41 = scmp.eq.s32.totalorder %s15, 0
    %p42 = por %p40, %p41
    %s44 = sadd.s32 %s43, 1
    %p47 = scmp.eq.s32.totalorder %s9, 1
    %p48 = scmp.ne.s32.totalorder %s43, %s45
    %p49 = scmp.eq.s32.totalorder %s9, 0
    %p50 = por %p48, %p49
    %p51 = scmp.ne.s32.totalorder %s43, %s45
    %p52 = scmp.eq.s32.totalorder %s14, 1
    %p53 = por %p51, %p52
    %p54 = scmp.ne.s32.totalorder %s45, %s46
    %p55 = scmp.eq.s32.totalorder %s14, 0
    %p56 = por %p54, %p55
    %p57 = scmp.ne.s32.totalorder %s45, %s46
    %p58 = scmp.eq.s32.totalorder %s15, 1
    %p59 = por %p57, %p58
    %p61 = scmp.ne.s32.totalorder %s46, %s60
    %p62 = scmp.eq.s32.totalorder %s15, 0
    %p63 = por %p61, %p62
    %s65 = sadd.s32 %s64, 1
    %p68 = scmp.eq.s32.totalorder %s9, 1
    %p69 = scmp.ne.s32.totalorder %s64, %s66
    %p70 = scmp.eq.s32.totalorder %s9, 0
    %p71 = por %p69, %p70
    %p72 = scmp.ne.s32.totalorder %s64, %s66
    %p73 = scmp.eq.s32.totalorder %s14, 1
    %p74 = por %p72, %p73
    %p75 = scmp.ne.s32.totalorder %s66, %s67
    %p76 = scmp.eq.s32.totalorder %s14, 0
    %p77 = por %p75, %p76
    %p78 = scmp.ne.s32.totalorder %s66, %s67
    %p79 = scmp.eq.s32.totalorder %s15, 1
    %p80 = por %p78, %p79
    %p82 = scmp.ne.s32.totalorder %s67, %s81
    %p83 = scmp.eq.s32.totalorder %s15, 0
    %p84 = por %p82, %p83
    %s85 = ssub.s32 %s9, %s16
    %p86 = scmp.eq.s32.totalorder %s85, 0
    %s88 = sadd.s32 %s87, 1
    %s89 = scalar_select %p86, %s87, %s88
    %p92 = pneg %p86
    %p93 = scmp.eq.s32.totalorder %s9, 1
    %p94 = por %p92, %p93
    %p95 = scmp.ne.s32.totalorder %s87, %s90
    %p96 = scmp.eq.s32.totalorder %s9, 0
    %p97 = por %p95, %p96
    %p98 = scmp.ne.s32.totalorder %s87, %s90
    %p99 = scmp.eq.s32.totalorder %s14, 1
    %p100 = por %p98, %p99
    %p101 = scmp.ne.s32.totalorder %s90, %s91
    %p102 = scmp.eq.s32.totalorder %s14, 0
    %p103 = por %p101, %p102
    %p104 = scmp.ne.s32.totalorder %s90, %s91
    %p105 = scmp.eq.s32.totalorder %s15, 1
    %p106 = por %p104, %p105
    %p108 = scmp.ne.s32.totalorder %s91, %s107
    %p109 = scmp.eq.s32.totalorder %s15, 0
    %p110 = por %p108, %p109
    %p111 = scmp.le.s32.totalorder 1, %s9
    %p112 = scmp.lt.s32.totalorder %s9, 3
    %p113 = pnand %p111, %p112
    %p114 = pneg %p113
    // Predicated region
    $region9: #{conv_bn.3} parent=5 // pred_check
      _
    $region10: #{conv_bn.3} parent=5 // pred_check_branch
      %116 = sbr.rel (%p113) target = $region12
    $region11: #{conv_bn.3} parent=5 // pred_region
      %s117 = ssub.s32 %s9, 1
      // Predicated region
      $region13: #{conv_bn.3} parent=11 // pred_check
        %p118 = pneg %p56
      $region14: #{conv_bn.3} parent=11 // pred_check_branch
        %120 = sbr.rel (%p118) target = $region16
      $region15: #{conv_bn.3} parent=11 // pred_region
        _
      $region16: #{conv_bn.3} parent=11 // pred_fallthru
        _
      // Predicated region
      $region17: #{conv_bn.3} parent=11 // pred_check
        %p121 = pneg %p77
      $region18: #{conv_bn.3} parent=11 // pred_check_branch
        %123 = sbr.rel (%p121) target = $region20
      $region19: #{conv_bn.3} parent=11 // pred_region
        _
      $region20: #{conv_bn.3} parent=11 // pred_fallthru
        _
    $region12: #{conv_bn.3} parent=5 // pred_fallthru
      _
    %p124 = scmp.lt.s32.totalorder %s9, 2
    // Predicated region
    $region21: #{conv_bn.3} parent=5 // pred_check
      %p125 = pneg %p124
    $region22: #{conv_bn.3} parent=5 // pred_check_branch
      %127 = sbr.rel (%p125) target = $region24
    $region23: #{conv_bn.3} parent=5 // pred_region
      // Predicated region
      $region25: #{conv_bn.3} parent=23 // pred_check
        %p128 = pneg %p29
      $region26: #{conv_bn.3} parent=23 // pred_check_branch
        %130 = sbr.rel (%p128) target = $region28
      $region27: #{conv_bn.3} parent=23 // pred_region
        %s131 = smul.u32 2, %s9
        %p132 = scmp.lt.s32.totalorder %s131, 3
        %s133 = scalar_select %p132, %s131, 3
        %s134 = smul.addr %s133, 8
        %s135 = scalar_lea.vmem %s0, %s134
        %s136 = smul.u32 2, %s9
      $region28: #{conv_bn.3} parent=23 // pred_fallthru
        _
    $region24: #{conv_bn.3} parent=5 // pred_fallthru
      _
    %p137 = scmp.le.s32.totalorder 1, %s9
    %p138 = scmp.lt.s32.totalorder %s9, 3
    %p139 = pnand %p137, %p138
    %p140 = pneg %p139
    // Predicated region
    $region29: #{conv_bn.3} parent=5 // pred_check
      _
    $region30: #{conv_bn.3} parent=5 // pred_check_branch
      %142 = sbr.rel (%p139) target = $region32
    $region31: #{conv_bn.3} parent=5 // pred_region
      %s143 = ssub.s32 %s9, 1
      %s144 = smul.u32 2, %s14
      %p145 = scmp.lt.s32.totalorder %s144, 3
      %s146 = scalar_select %p145, %s144, 3
      %s147 = smul.addr %s146, 8
      %s148 = scalar_lea.vmem %s0, %s147
      %p149 = pneg %p35
      %p150 = pneg %p32
      %p151 = pneg %p56
      %p152 = pneg %p53
      %p153 = pneg %p77
      %p154 = pneg %p74
      %p155 = pneg %p103
      %p156 = pneg %p100
      %s157 = smul.u32 2, %s14
      %p158 = scmp.lt.s32.totalorder %s157, 3
      %s159 = scalar_select %p158, %s157, 3
      %s160 = smul.addr %s159, 8
      %s161 = scalar_lea.vmem %s3, %s160
      %s162 = smul.u32 2, %s14
      %p163 = scmp.lt.s32.totalorder %s162, 3
      %s164 = scalar_select %p163, %s162, 3
      %s165 = smul.addr %s164, 8
      %s166 = scalar_lea.vmem %s0, %s165
      %s167 = smul.u32 2, %s14
      %s168 = smul.u32 2, %s14
      %p169 = scmp.lt.s32.totalorder %s168, 3
      %s170 = scalar_select %p169, %s168, 3
      %s171 = smul.addr %s170, 8
      %s172 = scalar_lea.vmem %s3, %s171
      %s173 = smul.u32 2, %s14
      %v174 = vld [vmem:[%s166] sm:$0xff]
      %v175 = vld [vmem:[%s166 + $0x8] sm:$0xff]
      %v176 = vld [vmem:[%s1] sm:$0xff]
      %178 = vset.pattern.permute.xlu0 0
      %179 = vperm.xlu0 %178, %v176
      %v180 = vpop.permute.xlu0 %179
      %v182 = vmul.f32 %v174, %v180
      %v183 = vmul.f32 %v175, %v180
      %v184 = vld [vmem:[%s2] sm:$0xff]
      %186 = vset.pattern.permute.xlu0 0
      %187 = vperm.xlu0 %186, %v184
      %v188 = vpop.permute.xlu0 %187
      %v190 = vadd.f32 %v182, %v188
      %v191 = vadd.f32 %v183, %v188
      %192 = vst [vmem:[%s172] sm:$0xff] %v190
      %193 = vst [vmem:[%s172 + $0x8] sm:$0xff] %v191
      %s194 = smul.u32 2, %s14
      %p195 = scmp.lt.s32.totalorder %s194, 3
      %s196 = scalar_select %p195, %s194, 3
      %s197 = smul.addr %s196, 8
      %s198 = scalar_lea.vmem %s3, %s197
      // Predicated region
      $region33: #{conv_bn.3} parent=31 // pred_check
        %p199 = pneg %p100
      $region34: #{conv_bn.3} parent=31 // pred_check_branch
        %201 = sbr.rel (%p199) target = $region36
      $region35: #{conv_bn.3} parent=31 // pred_region
        %s202 = smul.u32 2, %s14
      $region36: #{conv_bn.3} parent=31 // pred_fallthru
        _
    $region32: #{conv_bn.3} parent=5 // pred_fallthru
      _
    %p203 = scmp.le.s32.totalorder 2, %s9
    // Predicated region
    $region37: #{conv_bn.3} parent=5 // pred_check
      %p204 = pneg %p203
    $region38: #{conv_bn.3} parent=5 // pred_check_branch
      %206 = sbr.rel (%p204) target = $region40
    $region39: #{conv_bn.3} parent=5 // pred_region
      %s207 = ssub.s32 %s9, 2
      // Predicated region
      $region41: #{conv_bn.3} parent=39 // pred_check
        %p208 = pneg %p106
      $region42: #{conv_bn.3} parent=39 // pred_check_branch
        %210 = sbr.rel (%p208) target = $region44
      $region43: #{conv_bn.3} parent=39 // pred_region
        %s211 = smul.u32 2, %s15
        %p212 = scmp.lt.s32.totalorder %s211, 3
        %s213 = scalar_select %p212, %s211, 3
        %s214 = smul.addr %s213, 8
        %s215 = scalar_lea.vmem %s3, %s214
      $region44: #{conv_bn.3} parent=39 // pred_fallthru
        _
    $region40: #{conv_bn.3} parent=5 // pred_fallthru
      _
  $region6: #{conv_bn.3} parent=0 // loop_footer
    %s13 = sadd.s32 1, %s9
  $region7: #{conv_bn.3} parent=0 // loop_footer_branch
    %8 = sbr.rel target = $region3
  $region8: #{conv_bn.3} parent=0 // loop_exit
    _

</llo_original>
